<compile_context>
chip_gen: v7x
topology: tpu7x:2x2x1
jax: 0.10.0
libtpu: 0.0.40
codegen_flags: <defaults>
</compile_context>

<pallas_src>
import jax
import jax.numpy as jnp
from jax.experimental import pallas as pl
from jax.experimental.pallas import tpu as pltpu


def _wac_matt_kernel(lens_ref,    # (B_pad,) int32  SMEM (scalar prefetch)
                     embeds_ref,  # (TB, L, D) f32  VMEM (batch tile)
                     u1_ref,      # (1, D)    f32   VMEM (resident)
                     wf_ref,      # (D, 1)    f32   VMEM (resident, fused weight)
                     bf_ref,      # (1, 1)    f32   SMEM (fused bias)
                     out_ref):    # (TB, 1)   f32
    TB, L, D = embeds_ref.shape
    b0 = pl.program_id(0) * TB

    e = embeds_ref[...]            # (TB, L, D)
    u = u1_ref[...]                # (1, D)

    # --- length mask built in-kernel from SMEM lens (no mask DMA) ---
    col = jax.lax.broadcasted_iota(jnp.int32, (TB, L), 1)
    row = jax.lax.broadcasted_iota(jnp.int32, (TB, L), 0)
    mask = jnp.zeros((TB, L), jnp.float32)
    for r in range(TB):            # TB is small (<= 8) and static
        ln = lens_ref[b0 + r]      # scalar SMEM read
        mask = jnp.where((row == r) & (col < ln), 1.0, mask)

    # --- cosine-similarity attention over the sequence axis (u1; the ref's
    #     att2 is dead code in forward() and is not computed) ---
    dot = jnp.sum(e * u[None, :, :], axis=-1)                       # (TB, L)
    e_norm = jnp.sqrt(jnp.sum(e * e, axis=-1))                      # (TB, L)
    u_norm = jnp.sqrt(jnp.sum(u * u, axis=-1, keepdims=True))       # (1, 1)
    sim = dot / jnp.maximum(e_norm * u_norm, 1e-8)
    sim_exp = jnp.exp(sim) * mask                                   # (TB, L)
    denom = jnp.sum(sim_exp, axis=1, keepdims=True)                 # (TB, 1)
    # Guard zero-length (padded) rows; identical to the reference for lens > 0.
    att = sim_exp / jnp.maximum(denom, 1e-30)                       # (TB, L)

    # --- attention applied BEFORE the projections, with all linear layers
    #     folded into a single (D, 1) weight + scalar bias ---
    c = jnp.sum(att[:, :, None] * e, axis=1)                        # (TB, D)
    score = jnp.dot(c, wf_ref[...],
                    preferred_element_type=jnp.float32) + bf_ref[0, 0]  # (TB, 1)
    out_ref[...] = jax.nn.sigmoid(score)


def wac_matt_forward(X, lens, params, *, block_b=None):
    emb = params["emb"]                      # (V, D)
    B, L = X.shape
    D = emb.shape[1]

    # Glue: embedding gather (data dependent).
    # TODO(synk): move the gather in-kernel (scalar-prefetched X + manual DMA
    # from an HBM-resident table) to avoid the HBM round trip of `embeds`.
    embeds = jnp.take(emb, X, axis=0).astype(jnp.float32)           # (B, L, D)

    # Fused parameters (exact algebra, see module docstring).
    wf = ((params["w0"] + params["w1"]).T @ params["wl"].T).astype(jnp.float32)  # (D, 1)
    bf = ((params["b0"] + params["b1"]) @ params["wl"].T
          + params["bl"]).reshape(1, 1).astype(jnp.float32)                      # (1, 1)
    u1 = params["u1"].reshape(1, D).astype(jnp.float32)

    # Batch tiling: TB == B for tiny batches, else multiple-of-8 tiles
    # (keeps every block's second-minor dim legal); pad B if needed.
    tb = block_b if block_b is not None else (B if B <= 8 else 8)
    B_pad = ((B + tb - 1) // tb) * tb
    if B_pad != B:
        embeds = jnp.pad(embeds, ((0, B_pad - B), (0, 0), (0, 0)))
        lens = jnp.pad(lens, (0, B_pad - B))
    lens = lens.astype(jnp.int32)

    grid_spec = pltpu.PrefetchScalarGridSpec(
        num_scalar_prefetch=1,                       # lens -> SMEM
        grid=(B_pad // tb,),
        in_specs=[
            pl.BlockSpec((tb, L, D), lambda b, lens_ref: (b, 0, 0)),   # embeds tile
            pl.BlockSpec((1, D), lambda b, lens_ref: (0, 0)),          # u1 (resident)
            pl.BlockSpec((D, 1), lambda b, lens_ref: (0, 0)),          # fused weight
            pl.BlockSpec(memory_space=pltpu.MemorySpace.SMEM),         # fused bias
        ],
        out_specs=pl.BlockSpec((tb, 1), lambda b, lens_ref: (b, 0)),
    )
    out = pl.pallas_call(
        _wac_matt_kernel,
        out_shape=jax.ShapeDtypeStruct((B_pad, 1), jnp.float32),
        grid_spec=grid_spec,
        compiler_params=pltpu.CompilerParams(
            dimension_semantics=("parallel",)),
    )(lens, embeds, u1, wf, bf)
    return out[:B]


def ref_forward(X, lens, p):
    """Pure-JAX reference mirroring the PyTorch module (for correctness check)."""
    embeds = p["emb"][X]
    B, L = X.shape
    mask = (jnp.arange(L)[None, :] < lens[:, None]).astype(jnp.float32)
    dot = jnp.sum(embeds * p["u1"][None, None, :], axis=-1)
    denom = jnp.maximum(jnp.linalg.norm(embeds, axis=-1) * jnp.linalg.norm(p["u1"]), 1e-8)
    sim = jnp.exp(dot / denom) * mask
    att = sim / jnp.sum(sim, axis=1, keepdims=True)
    h0 = embeds @ p["w0"].T + p["b0"]
    h1 = embeds @ p["w1"].T + p["b1"]
    ave1 = jnp.sum(att[:, :, None] * h0, axis=1)
    ave2 = jnp.sum(att[:, :, None] * h1, axis=1)
    score = (ave1 + ave2) @ p["wl"].T + p["bl"]
    return jax.nn.sigmoid(score)


def init_params(key, vocab_size, embedding_dim):
    ks = jax.random.split(key, 9)
    D = embedding_dim
    bound = 1.0 / jnp.sqrt(D)
    return {
        # embed_init = 0.2 * (rand(V, D) - 0.5)
        "emb": 0.2 * (jax.random.uniform(ks[0], (vocab_size, D), jnp.float32) - 0.5),
        "u1": jax.random.normal(ks[1], (D,), jnp.float32),
        "u2": jax.random.normal(ks[2], (D,), jnp.float32),   # unused in forward (dead code in ref)
        "w0": jax.random.uniform(ks[3], (D, D), jnp.float32, -bound, bound),
        "b0": jax.random.uniform(ks[4], (D,), jnp.float32, -bound, bound),
        "w1": jax.random.uniform(ks[5], (D, D), jnp.float32, -bound, bound),
        "b1": jax.random.uniform(ks[6], (D,), jnp.float32, -bound, bound),
        "wl": jax.random.uniform(ks[7], (1, D), jnp.float32, -bound, bound),
        "bl": jax.random.uniform(ks[8], (1,), jnp.float32, -bound, bound),
    }


if __name__ == "__main__":
    key = jax.random.PRNGKey(0)
    k_param, k_x = jax.random.split(key)

    vocab_size, embedding_dim = 50, 32
    batch, maxlen = 2, 8

    params = init_params(k_param, vocab_size, embedding_dim)
    X = jax.random.randint(k_x, (batch, maxlen), 0, vocab_size, dtype=jnp.int32)
    lens = jnp.array([maxlen, 5], dtype=jnp.int32)

    prob = wac_matt_forward(X, lens, params)
    prob = jax.block_until_ready(prob)

    expected = ref_forward(X, lens, params)
    assert prob.shape == (batch, 1)
    assert jnp.allclose(prob, expected, atol=1e-5, rtol=1e-5), (prob, expected)

    print("KERNEL_OK")
</pallas_src>

<mosaic_0001>
module attributes {stable_mosaic.version = 11 : i64} {
  func.func @_wac_matt_kernel(%arg0: i32, %arg1: memref<2xi32, #tpu.memory_space<smem>>, %arg2: memref<2x8x32xf32, #tpu.memory_space<vmem>>, %arg3: memref<1x32xf32, #tpu.memory_space<vmem>>, %arg4: memref<32x1xf32, #tpu.memory_space<vmem>>, %arg5: memref<1x1xf32, #tpu.memory_space<smem>>, %arg6: memref<2x1xf32, #tpu.memory_space<vmem>>) attributes {dimension_semantics = [#tpu.dimension_semantics<parallel>], iteration_bounds = array<i64: 1>, scalar_prefetch = 1 : i64, scratch_operands = 0 : i64, tpu.core_type = #tpu.core_type<tc>, window_params = [{transform_indices = @transform_0, window_bounds = array<i64: 2, 8, 32>}, {pipeline_mode = #tpu.pipeline_mode<synchronous>, transform_indices = @transform_1, window_bounds = array<i64: 1, 32>}, {pipeline_mode = #tpu.pipeline_mode<synchronous>, transform_indices = @transform_2, window_bounds = array<i64: 32, 1>}, {transform_indices = @transform_3, window_bounds = array<i64: 1, 1>}, {transform_indices = @transform_4, window_bounds = array<i64: 2, 1>}]} {
    %c2_i32 = arith.constant 2 : i32
    %0 = arith.muli %arg0, %c2_i32 : i32
    %c0 = arith.constant 0 : index
    %c0_0 = arith.constant 0 : index
    %c0_1 = arith.constant 0 : index
    %1 = vector.load %arg2[%c0, %c0_0, %c0_1] : memref<2x8x32xf32, #tpu.memory_space<vmem>>, vector<2x8x32xf32>
    %c0_2 = arith.constant 0 : index
    %c0_3 = arith.constant 0 : index
    %2 = vector.load %arg3[%c0_2, %c0_3] : memref<1x32xf32, #tpu.memory_space<vmem>>, vector<1x32xf32>
    %3 = tpu.iota {dimensions = array<i32: 1>} : vector<2x8xi32>
    %4 = tpu.iota {dimensions = array<i32: 0>} : vector<2x8xi32>
    %cst = arith.constant 0.000000e+00 : f32
    %5 = vector.broadcast %cst : f32 to vector<2x8xf32>
    %c0_i32 = arith.constant 0 : i32
    %6 = arith.addi %0, %c0_i32 : i32
    %7 = arith.index_cast %6 : i32 to index
    %8 = memref.load %arg1[%7] : memref<2xi32, #tpu.memory_space<smem>>
    %c0_i32_4 = arith.constant 0 : i32
    %9 = vector.broadcast %c0_i32_4 : i32 to vector<2x8xi32>
    %10 = arith.cmpi eq, %4, %9 : vector<2x8xi32>
    %11 = vector.broadcast %8 : i32 to vector<2x8xi32>
    %12 = arith.cmpi slt, %3, %11 : vector<2x8xi32>
    %13 = arith.andi %10, %12 : vector<2x8xi1>
    %cst_5 = arith.constant 1.000000e+00 : f32
    %14 = vector.broadcast %cst_5 : f32 to vector<2x8xf32>
    %15 = arith.select %13, %14, %5 : vector<2x8xi1>, vector<2x8xf32>
    %c1_i32 = arith.constant 1 : i32
    %16 = arith.addi %0, %c1_i32 : i32
    %17 = arith.index_cast %16 : i32 to index
    %18 = memref.load %arg1[%17] : memref<2xi32, #tpu.memory_space<smem>>
    %c1_i32_6 = arith.constant 1 : i32
    %19 = vector.broadcast %c1_i32_6 : i32 to vector<2x8xi32>
    %20 = arith.cmpi eq, %4, %19 : vector<2x8xi32>
    %21 = vector.broadcast %18 : i32 to vector<2x8xi32>
    %22 = arith.cmpi slt, %3, %21 : vector<2x8xi32>
    %23 = arith.andi %20, %22 : vector<2x8xi1>
    %cst_7 = arith.constant 1.000000e+00 : f32
    %24 = vector.broadcast %cst_7 : f32 to vector<2x8xf32>
    %25 = arith.select %23, %24, %15 : vector<2x8xi1>, vector<2x8xf32>
    %26 = vector.shape_cast %2 : vector<1x32xf32> to vector<1x1x32xf32>
    %27 = vector.broadcast %26 : vector<1x1x32xf32> to vector<2x8x32xf32>
    %28 = arith.mulf %1, %27 : vector<2x8x32xf32>
    %cst_8 = arith.constant dense<0.000000e+00> : vector<2x8xf32>
    %29 = vector.multi_reduction <add>, %28, %cst_8 [2] : vector<2x8x32xf32> to vector<2x8xf32>
    %30 = arith.mulf %1, %1 : vector<2x8x32xf32>
    %cst_9 = arith.constant dense<0.000000e+00> : vector<2x8xf32>
    %31 = vector.multi_reduction <add>, %30, %cst_9 [2] : vector<2x8x32xf32> to vector<2x8xf32>
    %32 = math.sqrt %31 : vector<2x8xf32>
    %33 = arith.mulf %2, %2 : vector<1x32xf32>
    %cst_10 = arith.constant dense<0.000000e+00> : vector<1xf32>
    %34 = vector.multi_reduction <add>, %33, %cst_10 [1] : vector<1x32xf32> to vector<1xf32>
    %35 = vector.shape_cast %34 : vector<1xf32> to vector<1x1xf32>
    %36 = math.sqrt %35 : vector<1x1xf32>
    %37 = vector.broadcast %36 : vector<1x1xf32> to vector<2x8xf32>
    %38 = arith.mulf %32, %37 : vector<2x8xf32>
    %cst_11 = arith.constant 9.99999993E-9 : f32
    %39 = vector.broadcast %cst_11 : f32 to vector<2x8xf32>
    %40 = arith.maximumf %38, %39 : vector<2x8xf32>
    %41 = arith.divf %29, %40 : vector<2x8xf32>
    %42 = math.exp %41 : vector<2x8xf32>
    %43 = arith.mulf %42, %25 : vector<2x8xf32>
    %cst_12 = arith.constant dense<0.000000e+00> : vector<2xf32>
    %44 = vector.multi_reduction <add>, %43, %cst_12 [1] : vector<2x8xf32> to vector<2xf32>
    %45 = vector.shape_cast %44 : vector<2xf32> to vector<2x1xf32>
    %cst_13 = arith.constant 1.000000e-30 : f32
    %46 = vector.broadcast %cst_13 : f32 to vector<2x1xf32>
    %47 = arith.maximumf %45, %46 : vector<2x1xf32>
    %48 = vector.broadcast %47 : vector<2x1xf32> to vector<2x8xf32>
    %49 = arith.divf %43, %48 : vector<2x8xf32>
    %50 = vector.shape_cast %49 : vector<2x8xf32> to vector<2x8x1xf32>
    %51 = vector.broadcast %50 : vector<2x8x1xf32> to vector<2x8x32xf32>
    %52 = arith.mulf %51, %1 : vector<2x8x32xf32>
    %cst_14 = arith.constant dense<0.000000e+00> : vector<2x32xf32>
    %53 = vector.multi_reduction <add>, %52, %cst_14 [1] : vector<2x8x32xf32> to vector<2x32xf32>
    %c0_15 = arith.constant 0 : index
    %c0_16 = arith.constant 0 : index
    %54 = vector.load %arg4[%c0_15, %c0_16] : memref<32x1xf32, #tpu.memory_space<vmem>>, vector<32x1xf32>
    %cst_17 = arith.constant dense<0.000000e+00> : vector<2x1xf32>
    %55 = tpu.matmul %53, %54, %cst_17 {dimension_numbers = #tpu.dot_dimension_numbers<[1], [0], [0], [1], [0, 0, 1, 1], [], []>} : vector<2x32xf32>, vector<32x1xf32>, vector<2x1xf32> -> vector<2x1xf32>
    %c0_18 = arith.constant 0 : index
    %c0_19 = arith.constant 0 : index
    %56 = memref.load %arg5[%c0_18, %c0_19] : memref<1x1xf32, #tpu.memory_space<smem>>
    %57 = vector.broadcast %56 : f32 to vector<2x1xf32>
    %58 = arith.addf %55, %57 : vector<2x1xf32>
    %59 = arith.negf %58 : vector<2x1xf32>
    %60 = math.exp %59 : vector<2x1xf32>
    %cst_20 = arith.constant 1.000000e+00 : f32
    %61 = vector.broadcast %cst_20 : f32 to vector<2x1xf32>
    %62 = arith.addf %61, %60 : vector<2x1xf32>
    %63 = arith.divf %61, %62 : vector<2x1xf32>
    %c0_21 = arith.constant 0 : index
    %c0_22 = arith.constant 0 : index
    %64 = vector.load %arg6[%c0_21, %c0_22] : memref<2x1xf32, #tpu.memory_space<vmem>>, vector<2x1xf32>
    tpu.vector_store %arg6[%c0_21, %c0_22], %63 {strides = array<i32>} : memref<2x1xf32, #tpu.memory_space<vmem>>, vector<2x1xf32>,
    return
  }
  func.func @transform_0(%arg0: i32, %arg1: memref<2xi32, #tpu.memory_space<smem>>) -> (i32, i32, i32) {
    %c0_i32 = arith.constant 0 : i32
    %c0_i32_0 = arith.constant 0 : i32
    %c0_i32_1 = arith.constant 0 : i32
    return %arg0, %c0_i32, %c0_i32_0 : i32, i32, i32
  }
  func.func @transform_1(%arg0: i32, %arg1: memref<2xi32, #tpu.memory_space<smem>>) -> (i32, i32) {
    %c0_i32 = arith.constant 0 : i32
    %c0_i32_0 = arith.constant 0 : i32
    %c0_i32_1 = arith.constant 0 : i32
    return %c0_i32, %c0_i32_0 : i32, i32
  }
  func.func @transform_2(%arg0: i32, %arg1: memref<2xi32, #tpu.memory_space<smem>>) -> (i32, i32) {
    %c0_i32 = arith.constant 0 : i32
    %c0_i32_0 = arith.constant 0 : i32
    %c0_i32_1 = arith.constant 0 : i32
    return %c0_i32, %c0_i32_0 : i32, i32
  }
  func.func @transform_3(%arg0: i32, %arg1: memref<2xi32, #tpu.memory_space<smem>>) -> (i32, i32) {
    %c0_i32 = arith.constant 0 : i32
    %c0_i32_0 = arith.constant 0 : i32
    %c0_i32_1 = arith.constant 0 : i32
    return %c0_i32, %c0_i32_0 : i32, i32
  }
  func.func @transform_4(%arg0: i32, %arg1: memref<2xi32, #tpu.memory_space<smem>>) -> (i32, i32) {
    %c0_i32 = arith.constant 0 : i32
    %c0_i32_0 = arith.constant 0 : i32
    return %arg0, %c0_i32 : i32, i32
  }
}

</mosaic_0001>

<llo_original>
// kernel: tpu_custom_call.1
$region0: #{tpu_custom_call.1}
  #allocation0 [shape = 'u32[]', space=smem, size = 0x4, offset = 0x4, fixed_abs, tag = 'smem constant byte address 0x4 - core index']
  #allocation1 [shape = 'u32[144,128]{1,0:T(1,128)}', space=vmem, size = 0x12000, scoped, tag = 'internal scratch']
  #allocation2 [shape = 's32[1]{0}', space=sflag, size = 0x4, scoped, tag = 'scoped memory for tpu_custom_call.1']
  #allocation3 [shape = 'u8[512]{0}', space=smem, size = 0x200, scoped, tag = 'prefetched SMEM operand 0']
  #allocation4 [shape = 'f32[1,1]{1,0:T(1,128)S(6)}', space=smem, size = 0x200, scoped, tag = 'scoped memory for tpu_custom_call.1']
  %s0 = inlined_call_operand.vmem [shape: s32[2], index: 0, kind: input, shape index: {}]
  %s1 = inlined_call_operand.vmem [shape: f32[2,8,32], index: 1, kind: input, shape index: {}]
  %s2 = inlined_call_operand.vmem [shape: f32[1,32], index: 2, kind: input, shape index: {}]
  %s3 = inlined_call_operand.vmem [shape: f32[32,1], index: 3, kind: input, shape index: {}]
  %s4 = inlined_call_operand.<no memory space> [shape: f32[1,1], index: 4, kind: input, shape index: {}]
  %s5 = inlined_call_operand.vmem [shape: f32[2,1], index: 5, kind: output, shape index: {}]
  %s6 = sld [smem:[#allocation0]]
  $region26: #{tpu_custom_call.1} parent=0
    _
  %s8 = ssub.s32 1, %s6
  %s9 = scalar_select 0, %s8, %s6
  %s10 = sshll.u32 %s0, 4
  %s11 = int_to_ptr.vmem [resolvable:$true] %s10
  %13 = dma.vmem_to_smem %s11, 16, [#allocation3], [#allocation2]
  %14 = sst [smem:[#allocation4]] %s4
  %15 = dma.done [#allocation2], 16
  %16 = sfence
  // Predicated region
  $region2: #{tpu_custom_call.1} parent=0 // pred_check
    _
  $region3: #{tpu_custom_call.1} parent=0 // pred_check_branch
    %18 = sbr.rel (0) target = $region5
  $region4: #{tpu_custom_call.1} parent=0 // pred_region
    _
  $region5: #{tpu_custom_call.1} parent=0 // pred_fallthru
    _
  // Predicated region
  $region6: #{tpu_custom_call.1} parent=0 // pred_check
    _
  $region7: #{tpu_custom_call.1} parent=0 // pred_check_branch
    %20 = sbr.rel (0) target = $region9
  $region8: #{tpu_custom_call.1} parent=0 // pred_region
    _
  $region9: #{tpu_custom_call.1} parent=0 // pred_fallthru
    _
  // Predicated region
  $region10: #{tpu_custom_call.1} parent=0 // pred_check
    _
  $region11: #{tpu_custom_call.1} parent=0 // pred_check_branch
    %22 = sbr.rel (0) target = $region13
  $region12: #{tpu_custom_call.1} parent=0 // pred_region
    _
  $region13: #{tpu_custom_call.1} parent=0 // pred_fallthru
    _
  // Predicated region
  $region14: #{tpu_custom_call.1} parent=0 // pred_check
    _
  $region15: #{tpu_custom_call.1} parent=0 // pred_check_branch
    %24 = sbr.rel (0) target = $region17
  $region16: #{tpu_custom_call.1} parent=0 // pred_region
    _
  $region17: #{tpu_custom_call.1} parent=0 // pred_fallthru
    _
  %s25 = smul.u32 0, 2
  %v26 = vld [vmem:[%s1] sm:$0xff]
  %v27 = vld [vmem:[%s1 + $0x8] sm:$0xff]
  %v28 = vld [vmem:[%s2] sm:$0x1]
  %v29 = vlaneseq
  %v30 = vand.u32 %v29, 127
  %v31 = vlaneseq
  %v32 = vshrl.u32 %v31, 7
  %s33 = sld [smem:[#allocation3 + %s25]]
  %vm34 = vcmp.eq.s32.totalorder %v32, 0
  %v35 = vstv %s33
  %vm36 = vcmp.lt.s32.totalorder %v30, %v35
  %vm37 = vmand %vm34, %vm36
  %v38 = vsel %vm37, 1.0, 0.0
  %s39 = sadd.s32 %s25, 1
  %s40 = sld [smem:[#allocation3 + %s39]]
  %vm41 = vcmp.eq.s32.totalorder %v32, 1
  %v42 = vstv %s40
  %vm43 = vcmp.lt.s32.totalorder %v30, %v42
  %vm44 = vmand %vm41, %vm43
  %v45 = vsel %vm44, 1.0, %v38
  %v47 = vlaneseq
  %v48 = vshrl.u32 %v47, 7
  %v49 = vsub.s32 0, %v48
  %v50 = vrot.slane %v28, %v49
  %v52 = vmul.f32 %v26, %v50
  %v53 = vmul.f32 %v27, %v50
  %vm54 = vcmask 261120
  %v55 = vsel %vm54, %v52, 0.0
  %56 = vadd.xlane.f32.xlu0 %v55
  %v57 = vpop.xlane.xlu0 %56
  %v58 = vsel %vm54, %v53, 0.0
  %59 = vadd.xlane.f32.xlu0 %v58
  %v60 = vpop.xlane.xlu0 %59
  %v61 = vmul.f32 %v26, %v26
  %v62 = vmul.f32 %v27, %v27
  %v63 = vsel %vm54, %v61, 0.0
  %64 = vadd.xlane.f32.xlu0 %v63
  %v65 = vpop.xlane.xlu0 %64
  %v66 = vsel %vm54, %v62, 0.0
  %67 = vadd.xlane.f32.xlu0 %v66
  %v68 = vpop.xlane.xlu0 %67
  %v69 = vrsqrt.pop %v65
  %v70 = vmul.f32 %v65, %v69
  %vm71 = vcmp.eq.f32.partialorder %v65, inf
  %v72 = vsel %vm71, %v65, %v70
  %vm73 = vcmp.eq.f32.partialorder %v65, 0.0
  %v74 = vand.u32 %v65, 2147483648
  %v75 = vsel %vm73, %v74, %v72
  %v76 = vrsqrt.pop %v68
  %v77 = vmul.f32 %v68, %v76
  %vm78 = vcmp.eq.f32.partialorder %v68, inf
  %v79 = vsel %vm78, %v68, %v77
  %vm80 = vcmp.eq.f32.partialorder %v68, 0.0
  %v81 = vand.u32 %v68, 2147483648
  %v82 = vsel %vm80, %v81, %v79
  %v83 = vmul.f32 %v28, %v28
  %vm84 = vcmask 253952
  %v85 = vsel %vm84, %v83, 0.0
  %86 = vadd.xlane.f32.xlu0 %v85
  %v87 = vpop.xlane.xlu0 %86
  %v88 = vrsqrt.pop %v87
  %v89 = vmul.f32 %v87, %v88
  %vm90 = vcmp.eq.f32.partialorder %v87, inf
  %v91 = vsel %vm90, %v87, %v89
  %vm92 = vcmp.eq.f32.partialorder %v87, 0.0
  %v93 = vand.u32 %v87, 2147483648
  %v94 = vsel %vm92, %v93, %v91
  %v95 = vlaneseq
  %v96 = vshrl.u32 %v95, 7
  %v97 = vsub.s32 0, %v96
  %v98 = vrot.slane %v94, %v97
  %v99 = vmul.f32 %v75, %v98
  %v100 = vmul.f32 %v82, %v98
  %v101 = vmax.f32 %v99, 1e-08
  %v102 = vmax.f32 %v100, 1e-08
  %v103 = vrcp.pop %v101
  %v104 = vmul.f32 %v57, %v103
  %v105 = vrcp.pop %v102
  %v106 = vmul.f32 %v60, %v105
  %v107 = vmul.f32 %v104, 1.442695
  %v108 = vpow.pop %v107
  %v109 = vmul.f32 %v106, 1.442695
  %v110 = vpow.pop %v109
  %v112 = vlaneseq
  %v113 = vshrl.u32 %v112, 7
  %v114 = vsub.s32 0, %v113
  %v115 = vrot.slane %v45, %v114
  %117 = vbcast.lane.b32.xlu0 %v115, 256
  %v118 = vpop.permute.xlu0 %117
  %v119 = vlaneseq
  %v120 = vshrl.u32 %v119, 7
  %v121 = vsub.s32 1, %v120
  %v122 = vrot.slane %v45, %v121
  %124 = vbcast.lane.b32.xlu0 %v122, 256
  %v125 = vpop.permute.xlu0 %124
  %v128 = vmul.f32 %v108, %v118
  %v129 = vmul.f32 %v110, %v125
  %132 = vset.pattern.permute.xlu0 0
  %133 = vperm.xlu0 %132, %v128
  %v134 = vpop.permute.xlu0 %133
  %135 = vset.pattern.permute.xlu0 0
  %136 = vperm.xlu0 %135, %v129
  %v137 = vpop.permute.xlu0 %136
  %v138 = vlaneseq
  %v139 = vshrl.u32 %v138, 7
  %v140 = vsub.s32 %v30, %v139
  %v141 = vrot.slane %v134, %v140
  %v142 = vlaneseq
  %v143 = vshrl.u32 %v142, 7
  %v144 = vsub.s32 %v30, %v143
  %v145 = vrot.slane %v137, %v144
  %vm146 = vcmask 1041409
  %v147 = vsel %vm146, %v145, %v141
  %vm149 = vcmask 58368
  %v150 = vsel %vm149, %v147, 0.0
  %151 = vadd.xlane.f32.xlu0 %v150
  %v152 = vpop.xlane.xlu0 %151
  %v153 = vmax.f32 %v152, 1e-30
  %v155 = vlaneseq
  %v156 = vshrl.u32 %v155, 7
  %v157 = vsub.s32 0, %v156
  %v158 = vrot.slane %v153, %v157
  %v159 = vlaneseq
  %v160 = vshrl.u32 %v159, 7
  %v161 = vsub.s32 1, %v160
  %v162 = vrot.slane %v153, %v161
  %v165 = vrcp.pop %v158
  %v166 = vmul.f32 %v128, %v165
  %v167 = vrcp.pop %v162
  %v168 = vmul.f32 %v129, %v167
  %170 = vset.pattern.permute.xlu0 0
  %171 = vperm.xlu0 %170, %v166
  %v172 = vpop.permute.xlu0 %171
  %175 = vset.pattern.permute.xlu0 0
  %176 = vperm.xlu0 %175, %v168
  %v177 = vpop.permute.xlu0 %176
  %v179 = vmul.f32 %v172, %v26
  %v180 = vmul.f32 %v177, %v27
  %v181 = vsel %vm54, %v179, 0.0
  %v182 = vrot.slane %v181, 4
  %v183 = vadd.f32 %v181, %v182
  %v184 = vrot.slane %v183, 2
  %v185 = vadd.f32 %v183, %v184
  %v186 = vrot.slane %v185, 1
  %v187 = vadd.f32 %v185, %v186
  %v188 = vsel %vm54, %v180, 0.0
  %v189 = vrot.slane %v188, 4
  %v190 = vadd.f32 %v188, %v189
  %v191 = vrot.slane %v190, 2
  %v192 = vadd.f32 %v190, %v191
  %v193 = vrot.slane %v192, 1
  %v194 = vadd.f32 %v192, %v193
  %v195 = vld [vmem:[%s3] sm:$0xff]
  %v196 = vld [vmem:[%s3 + $0x8] sm:$0xff]
  %v197 = vld [vmem:[%s3 + $0x10] sm:$0xff]
  %v198 = vld [vmem:[%s3 + $0x18] sm:$0xff]
  %s199 = sld [smem:[#allocation4]]
  %v200 = vstv %s199
  %v203 = vsel %vm146, %v194, %v187
  %v204 = vsel %vm54, %v203, 0
  %206 = vmatprep.subr.mxu0 0.0
  %207 = vmatpush1.msra.mxu0 %v195
  %208 = vmatprep.subr.mxu0 0.0
  %209 = vmatpush1.msra.mxu0 %v196
  %210 = vmatprep.subr.mxu0 0.0
  %211 = vmatpush1.msra.mxu0 %v197
  %212 = vmatprep.subr.mxu0 0.0
  %213 = vmatpush1.msra.mxu0 %v198
  %214 = vmatprep.subr.mxu0 0.0
  %215 = vmatpush1.msra.mxu0 0.0
  %216 = vmatprep.subr.mxu0 0.0
  %217 = vmatpush1.msra.mxu0 0.0
  %218 = vmatprep.subr.mxu0 0.0
  %219 = vmatpush1.msra.mxu0 0.0
  %220 = vmatprep.subr.mxu0 0.0
  %221 = vmatpush1.msra.mxu0 0.0
  %222 = vmatprep.subr.mxu0 0.0
  %223 = vmatpush1.msra.mxu0 0.0
  %224 = vmatprep.subr.mxu0 0.0
  %225 = vmatpush1.msra.mxu0 0.0
  %226 = vmatprep.subr.mxu0 0.0
  %227 = vmatpush1.msra.mxu0 0.0
  %228 = vmatprep.subr.mxu0 0.0
  %229 = vmatpush1.msra.mxu0 0.0
  %230 = vmatprep.subr.mxu0 0.0
  %231 = vmatpush1.msra.mxu0 0.0
  %232 = vmatprep.subr.mxu0 0.0
  %233 = vmatpush1.msra.mxu0 0.0
  %234 = vmatprep.subr.mxu0 0.0
  %235 = vmatpush1.msra.mxu0 0.0
  %236 = vmatprep.subr.mxu0 0.0
  %237 = vmatpush1.msra.mxu0 0.0
  %238 = vmatprep.subr.mxu0 0.0
  %239 = vmatpush1.msra.mxu0 0.0
  %240 = vmatprep.subr.mxu0 0.0
  %241 = vmatpush1.msra.mxu0 0.0
  %242 = vmatprep.subr.mxu0 0.0
  %243 = vmatpush1.msra.mxu0 0.0
  %244 = vmatprep.subr.mxu0 0.0
  %245 = vmatpush1.msra.mxu0 0.0
  %246 = vmatprep.subr.mxu0 0.0
  %247 = vmatpush1.msra.mxu0 0.0
  %248 = vmatprep.subr.mxu0 0.0
  %249 = vmatpush1.msra.mxu0 0.0
  %250 = vmatprep.subr.mxu0 0.0
  %251 = vmatpush1.msra.mxu0 0.0
  %252 = vmatprep.subr.mxu0 0.0
  %253 = vmatpush1.msra.mxu0 0.0
  %254 = vmatprep.subr.mxu0 0.0
  %255 = vmatpush1.msra.mxu0 0.0
  %256 = vmatprep.subr.mxu0 0.0
  %257 = vmatpush1.msra.mxu0 0.0
  %258 = vmatprep.subr.mxu0 0.0
  %259 = vmatpush1.msra.mxu0 0.0
  %260 = vmatprep.subr.mxu0 0.0
  %261 = vmatpush1.msra.mxu0 0.0
  %262 = vmatprep.subr.mxu0 0.0
  %263 = vmatpush1.msra.mxu0 0.0
  %264 = vmatprep.subr.mxu0 0.0
  %265 = vmatpush1.msra.mxu0 0.0
  %266 = vmatprep.subr.mxu0 0.0
  %267 = vmatpush1.msra.mxu0 0.0
  %268 = vmatprep.subr.mxu0 0.0
  %269 = vmatpush1.msra.mxu0 0.0
  %270 = vmatprep.mubr.f32.mxu0 0.0
  %271 = vmatmul.mubr.f32.gmra.mrb[0].mxu0 %v204
  %v272 = vpop.f32.mrb[0].mxu0
  %v273 = vadd.f32 %v200, %v272
  %v274 = vpop.f32.mrb[0].mxu0
  %275 = vdwg.mxu0
  %v276 = vxor.u32 %v273, 2147483648
  %v277 = vmul.f32 %v276, 1.442695
  %v278 = vpow.pop %v277
  %v279 = vadd.f32 %v278, 1.0
  %v280 = vrcp.pop %v279
  %v281 = vmul.f32 1.0, %v280
  %vm282 = vcmask 1024
  %283 = vst.msk [vmem:[%s5] sm:$0x3] %vm282, %v281
  // Predicated region
  $region18: #{tpu_custom_call.1} parent=0 // pred_check
    _
  $region19: #{tpu_custom_call.1} parent=0 // pred_check_branch
    %285 = sbr.rel (0) target = $region21
  $region20: #{tpu_custom_call.1} parent=0 // pred_region
    _
  $region21: #{tpu_custom_call.1} parent=0 // pred_fallthru
    _
  // Predicated region
  $region22: #{tpu_custom_call.1} parent=0 // pred_check
    _
  $region23: #{tpu_custom_call.1} parent=0 // pred_check_branch
    %287 = sbr.rel (0) target = $region25
  $region24: #{tpu_custom_call.1} parent=0 // pred_region
    _
  $region25: #{tpu_custom_call.1} parent=0 // pred_fallthru
    _

</llo_original>
